<compile_context>
chip_gen: v5e
topology: v5e:2x2
jax: 0.10.0
libtpu: 0.0.40
codegen_flags: <defaults>
</compile_context>

<pallas_src>
import functools

import jax
import jax.numpy as jnp
from jax.experimental import pallas as pl
from jax.experimental.pallas import tpu as pltpu


def _make_divisible(v, divisor, min_value=None):
    if min_value is None:
        min_value = divisor
    new_v = max(min_value, int(v + divisor / 2) // divisor * divisor)
    if new_v < 0.9 * v:
        new_v += divisor
    return new_v


@functools.lru_cache(maxsize=1)
def _vmem_capacity_bytes():
    """Physical VMEM bytes for this generation (best effort)."""
    try:
        cap = int(pltpu.get_tpu_info().vmem_capacity_bytes)
        if cap > 0:
            return cap
    except Exception:
        pass
    return 64 << 20  # conservative floor (v7x); v5e/v6e have 128 MiB


@functools.lru_cache(maxsize=1)
def _num_tensorcores():
    """Best-effort TensorCore count per device (v7x / megacore parts have 2)."""
    try:
        info = pltpu.get_tpu_info()
        for name in ("num_cores", "core_count", "tensorcore_count", "num_tensorcores"):
            n = getattr(info, name, None)
            if n:
                return int(n)
    except Exception:
        pass
    try:
        dev = jax.devices()[0]
        n = getattr(dev, "num_cores", None)
        if n:
            return int(n)
        kind = str(getattr(dev, "device_kind", "")).lower()
        if "v7" in kind or "v4" in kind or "v5p" in kind:
            return 2
    except Exception:
        pass
    return 1


def _se_kernel(x_ref, w1_ref, b1_ref, w2_ref, b2_ref, o_ref, *, inv_hw):
    # x_ref/o_ref: (Bt, C, HW)   w1: (C, Hid)  b1: (1, Hid)  w2: (Hid, C)  b2: (1, C)
    x = x_ref[...]

    # Squeeze: f32 lane-axis sum scaled by 1/HW (== AdaptiveAvgPool2d(1)).
    # Only this reduction runs in f32; the big tile is never kept live as f32.
    y = jnp.sum(x.astype(jnp.float32), axis=2) * inv_hw               # (Bt, C)

    # Excitation: Linear -> SiLU -> Linear -> Sigmoid on the tiny (Bt, C).
    # Kept in f32: these matmuls are microscopic and the kernel is HBM-bound,
    # so the bf16-MXU hygiene tweak is not worth the precision loss here.
    h = jnp.dot(y, w1_ref[...], preferred_element_type=jnp.float32) + b1_ref[...]
    h = h * jax.nn.sigmoid(h)                                          # SiLU
    s = jnp.dot(h, w2_ref[...], preferred_element_type=jnp.float32) + b2_ref[...]
    s = jax.nn.sigmoid(s)                                              # (Bt, C) f32

    # Scale: multiply in the tile's native dtype (sigmoid gate tolerates the
    # rounding for sub-f32 inputs; exact for f32).
    o_ref[...] = (x * s.astype(o_ref.dtype)[:, :, None]).astype(o_ref.dtype)


def _pick_batch_tile(B, bytes_per_batch, *, target_bytes=8 << 20, num_cores=1):
    """Largest divisor of B giving ~target-sized tiles.  On multi-TensorCore
    chips prefer an even (>= 2) grid-step count so both cores get equal work;
    on single-TC chips never force a split (the grid is a serial loop)."""
    cap = max(1, target_bytes // max(1, bytes_per_batch))
    cands = [d for d in range(1, B + 1) if B % d == 0 and d <= cap] or [1]
    if num_cores >= 2 and B >= 2:
        even = [d for d in cands if (B // d) % 2 == 0]
        if even:
            return max(even)
        multi = [d for d in cands if (B // d) >= 2]
        if multi:
            return max(multi)
    return max(cands)


@functools.partial(jax.jit, static_argnames=("block_batch",))
def se_layer(x_nchw, w1, b1, w2, b2, *, block_batch=None):
    """x_nchw: (B, C, H, W).  w1: (C, Hid), b1: (Hid,), w2: (Hid, C), b2: (C,)."""
    B, C, H, W = x_nchw.shape
    HW = H * W
    Hid = w1.shape[1]

    # Flatten spatial; NO padding -- the block's last two dims are the full
    # (C, HW) extents, so blocks are legal for any C / HW and there is no HBM
    # write amplification nor extra pad/slice passes.
    x = x_nchw.reshape(B, C, HW)

    itemsize = jnp.dtype(x_nchw.dtype).itemsize
    bytes_per_batch = C * HW * itemsize
    if block_batch is not None:
        Bt = int(block_batch)
    else:
        Bt = _pick_batch_tile(B, bytes_per_batch, num_cores=_num_tensorcores())
    assert B % Bt == 0, "block_batch must divide B"
    grid = (B // Bt,)

    # VMEM budget: double-buffered in/out tiles + resident weights + headroom,
    # clamped to ~75% of this generation's physical VMEM (generation-aware).
    tile_bytes = Bt * bytes_per_batch
    w_itemsize = jnp.dtype(w1.dtype).itemsize
    weight_bytes = (C * Hid + Hid + Hid * C + C) * w_itemsize
    need = 4 * tile_bytes + 2 * weight_bytes + (2 << 20)
    vmem_cap = int(0.75 * _vmem_capacity_bytes())
    vmem_bytes = int(min(max(need, 16 << 20), vmem_cap))

    kernel = functools.partial(_se_kernel, inv_hw=1.0 / float(HW))

    out = pl.pallas_call(
        kernel,
        out_shape=jax.ShapeDtypeStruct((B, C, HW), x_nchw.dtype),
        grid_spec=pltpu.PrefetchScalarGridSpec(
            num_scalar_prefetch=0,
            grid=grid,
            in_specs=[
                pl.BlockSpec((Bt, C, HW), lambda b: (b, 0, 0)),
                # Weights/biases: constant index_map -> the already-resident
                # block is re-used across grid steps (no re-DMA).
                pl.BlockSpec((C, Hid), lambda b: (0, 0)),
                pl.BlockSpec((1, Hid), lambda b: (0, 0)),
                pl.BlockSpec((Hid, C), lambda b: (0, 0)),
                pl.BlockSpec((1, C), lambda b: (0, 0)),
            ],
            out_specs=pl.BlockSpec((Bt, C, HW), lambda b: (b, 0, 0)),
        ),
        compiler_params=pltpu.CompilerParams(
            dimension_semantics=("parallel",),
            vmem_limit_bytes=vmem_bytes,
        ),
    )(x, w1, b1.reshape(1, Hid), w2, b2.reshape(1, C))

    return out.reshape(B, C, H, W)


def se_layer_ref(x_nchw, w1, b1, w2, b2):
    """Pure-JAX reference matching PyTorch SELayer.forward semantics."""
    y = jnp.mean(x_nchw.astype(jnp.float32), axis=(2, 3))   # (B, C)
    h = y @ w1 + b1
    h = h * jax.nn.sigmoid(h)
    s = jax.nn.sigmoid(h @ w2 + b2)                          # (B, C)
    return (x_nchw.astype(jnp.float32) * s[:, :, None, None]).astype(x_nchw.dtype)


def _run_case(key, B, C, H, W):
    inp = oup = C
    reduction = 4
    hidden = _make_divisible(inp // reduction, 8)

    kx, k1, k2, k3, k4 = jax.random.split(key, 5)
    x = jax.random.normal(kx, (B, C, H, W), dtype=jnp.float32)
    # PyTorch Linear stores W as (out, in); here we keep (in, out) so the
    # kernel computes y @ W + b.
    w1 = jax.random.normal(k1, (oup, hidden), dtype=jnp.float32) * 0.1
    b1 = jax.random.normal(k2, (hidden,), dtype=jnp.float32) * 0.1
    w2 = jax.random.normal(k3, (hidden, oup), dtype=jnp.float32) * 0.1
    b2 = jax.random.normal(k4, (oup,), dtype=jnp.float32) * 0.1

    out = jax.block_until_ready(se_layer(x, w1, b1, w2, b2))
    ref = se_layer_ref(x, w1, b1, w2, b2)
    assert out.shape == (B, C, H, W)
    assert jnp.allclose(out, ref, atol=1e-5, rtol=1e-5), "mismatch vs reference"


if __name__ == "__main__":
    key = jax.random.PRNGKey(0)
    k_a, k_b = jax.random.split(key)
    # Main small case: HW = 256 (naturally lane-dense).
    _run_case(k_a, B=2, C=4, H=16, W=16)
    # Small-spatial case: HW = 49 -> full-extent last dim, masked stores,
    # no pad/slice round trips.
    _run_case(k_b, B=2, C=8, H=7, W=7)
    print("KERNEL_OK")
</pallas_src>

<mosaic_0001>
module attributes {stable_mosaic.version = 11 : i64} {
  func.func @_se_kernel(%arg0: i32, %arg1: memref<2x4x256xf32, #tpu.memory_space<vmem>>, %arg2: memref<4x8xf32, #tpu.memory_space<vmem>>, %arg3: memref<1x8xf32, #tpu.memory_space<vmem>>, %arg4: memref<8x4xf32, #tpu.memory_space<vmem>>, %arg5: memref<1x4xf32, #tpu.memory_space<vmem>>, %arg6: memref<2x4x256xf32, #tpu.memory_space<vmem>>) attributes {dimension_semantics = [#tpu.dimension_semantics<parallel>], iteration_bounds = array<i64: 1>, scalar_prefetch = 0 : i64, scratch_operands = 0 : i64, tpu.core_type = #tpu.core_type<tc>, window_params = [{transform_indices = @transform_0, window_bounds = array<i64: 2, 4, 256>}, {pipeline_mode = #tpu.pipeline_mode<synchronous>, transform_indices = @transform_1, window_bounds = array<i64: 4, 8>}, {pipeline_mode = #tpu.pipeline_mode<synchronous>, transform_indices = @transform_2, window_bounds = array<i64: 1, 8>}, {pipeline_mode = #tpu.pipeline_mode<synchronous>, transform_indices = @transform_3, window_bounds = array<i64: 8, 4>}, {pipeline_mode = #tpu.pipeline_mode<synchronous>, transform_indices = @transform_4, window_bounds = array<i64: 1, 4>}, {transform_indices = @transform_5, window_bounds = array<i64: 2, 4, 256>}]} {
    %c0 = arith.constant 0 : index
    %c0_0 = arith.constant 0 : index
    %c0_1 = arith.constant 0 : index
    %0 = vector.load %arg1[%c0, %c0_0, %c0_1] : memref<2x4x256xf32, #tpu.memory_space<vmem>>, vector<2x4x256xf32>
    %cst = arith.constant dense<0.000000e+00> : vector<2x4xf32>
    %1 = vector.multi_reduction <add>, %0, %cst [2] : vector<2x4x256xf32> to vector<2x4xf32>
    %cst_2 = arith.constant 3.906250e-03 : f32
    %2 = vector.broadcast %cst_2 : f32 to vector<2x4xf32>
    %3 = arith.mulf %1, %2 : vector<2x4xf32>
    %c0_3 = arith.constant 0 : index
    %c0_4 = arith.constant 0 : index
    %4 = vector.load %arg2[%c0_3, %c0_4] : memref<4x8xf32, #tpu.memory_space<vmem>>, vector<4x8xf32>
    %cst_5 = arith.constant dense<0.000000e+00> : vector<2x8xf32>
    %5 = tpu.matmul %3, %4, %cst_5 {dimension_numbers = #tpu.dot_dimension_numbers<[1], [0], [0], [1], [0, 0, 1, 1], [], []>} : vector<2x4xf32>, vector<4x8xf32>, vector<2x8xf32> -> vector<2x8xf32>
    %c0_6 = arith.constant 0 : index
    %c0_7 = arith.constant 0 : index
    %6 = vector.load %arg3[%c0_6, %c0_7] : memref<1x8xf32, #tpu.memory_space<vmem>>, vector<1x8xf32>
    %7 = vector.broadcast %6 : vector<1x8xf32> to vector<2x8xf32>
    %8 = arith.addf %5, %7 : vector<2x8xf32>
    %9 = arith.negf %8 : vector<2x8xf32>
    %10 = math.exp %9 : vector<2x8xf32>
    %cst_8 = arith.constant 1.000000e+00 : f32
    %11 = vector.broadcast %cst_8 : f32 to vector<2x8xf32>
    %12 = arith.addf %11, %10 : vector<2x8xf32>
    %13 = arith.divf %11, %12 : vector<2x8xf32>
    %14 = arith.mulf %8, %13 : vector<2x8xf32>
    %c0_9 = arith.constant 0 : index
    %c0_10 = arith.constant 0 : index
    %15 = vector.load %arg4[%c0_9, %c0_10] : memref<8x4xf32, #tpu.memory_space<vmem>>, vector<8x4xf32>
    %cst_11 = arith.constant dense<0.000000e+00> : vector<2x4xf32>
    %16 = tpu.matmul %14, %15, %cst_11 {dimension_numbers = #tpu.dot_dimension_numbers<[1], [0], [0], [1], [0, 0, 1, 1], [], []>} : vector<2x8xf32>, vector<8x4xf32>, vector<2x4xf32> -> vector<2x4xf32>
    %c0_12 = arith.constant 0 : index
    %c0_13 = arith.constant 0 : index
    %17 = vector.load %arg5[%c0_12, %c0_13] : memref<1x4xf32, #tpu.memory_space<vmem>>, vector<1x4xf32>
    %18 = vector.broadcast %17 : vector<1x4xf32> to vector<2x4xf32>
    %19 = arith.addf %16, %18 : vector<2x4xf32>
    %20 = arith.negf %19 : vector<2x4xf32>
    %21 = math.exp %20 : vector<2x4xf32>
    %cst_14 = arith.constant 1.000000e+00 : f32
    %22 = vector.broadcast %cst_14 : f32 to vector<2x4xf32>
    %23 = arith.addf %22, %21 : vector<2x4xf32>
    %24 = arith.divf %22, %23 : vector<2x4xf32>
    %25 = vector.shape_cast %24 : vector<2x4xf32> to vector<2x4x1xf32>
    %26 = vector.broadcast %25 : vector<2x4x1xf32> to vector<2x4x256xf32>
    %27 = arith.mulf %0, %26 : vector<2x4x256xf32>
    %c0_15 = arith.constant 0 : index
    %c0_16 = arith.constant 0 : index
    %c0_17 = arith.constant 0 : index
    %28 = vector.load %arg6[%c0_15, %c0_16, %c0_17] : memref<2x4x256xf32, #tpu.memory_space<vmem>>, vector<2x4x256xf32>
    tpu.vector_store %arg6[%c0_15, %c0_16, %c0_17], %27 {strides = array<i32>} : memref<2x4x256xf32, #tpu.memory_space<vmem>>, vector<2x4x256xf32>,
    return
  }
  func.func @transform_0(%arg0: i32) -> (i32, i32, i32) {
    %c0_i32 = arith.constant 0 : i32
    %c0_i32_0 = arith.constant 0 : i32
    %c0_i32_1 = arith.constant 0 : i32
    return %arg0, %c0_i32, %c0_i32_0 : i32, i32, i32
  }
  func.func @transform_1(%arg0: i32) -> (i32, i32) {
    %c0_i32 = arith.constant 0 : i32
    %c0_i32_0 = arith.constant 0 : i32
    %c0_i32_1 = arith.constant 0 : i32
    return %c0_i32, %c0_i32_0 : i32, i32
  }
  func.func @transform_2(%arg0: i32) -> (i32, i32) {
    %c0_i32 = arith.constant 0 : i32
    %c0_i32_0 = arith.constant 0 : i32
    %c0_i32_1 = arith.constant 0 : i32
    return %c0_i32, %c0_i32_0 : i32, i32
  }
  func.func @transform_3(%arg0: i32) -> (i32, i32) {
    %c0_i32 = arith.constant 0 : i32
    %c0_i32_0 = arith.constant 0 : i32
    %c0_i32_1 = arith.constant 0 : i32
    return %c0_i32, %c0_i32_0 : i32, i32
  }
  func.func @transform_4(%arg0: i32) -> (i32, i32) {
    %c0_i32 = arith.constant 0 : i32
    %c0_i32_0 = arith.constant 0 : i32
    %c0_i32_1 = arith.constant 0 : i32
    return %c0_i32, %c0_i32_0 : i32, i32
  }
  func.func @transform_5(%arg0: i32) -> (i32, i32, i32) {
    %c0_i32 = arith.constant 0 : i32
    %c0_i32_0 = arith.constant 0 : i32
    %c0_i32_1 = arith.constant 0 : i32
    return %arg0, %c0_i32, %c0_i32_0 : i32, i32, i32
  }
}

</mosaic_0001>

<llo_original>
// kernel: se_layer.1
$region0: #{se_layer.1}
  #allocation0 [shape = 'u32[]', space=smem, size = 0x4, offset = 0x4, fixed_abs, tag = 'smem constant byte address 0x4 - core index']
  #allocation1 [shape = 'u32[72,128]{1,0:T(1,128)}', space=vmem, size = 0x9000, scoped, tag = 'internal scratch']
  %s0 = inlined_call_operand.vmem [shape: f32[2,4,256], index: 0, kind: input, shape index: {}]
  %s1 = inlined_call_operand.vmem [shape: f32[4,8], index: 1, kind: input, shape index: {}]
  %s2 = inlined_call_operand.vmem [shape: f32[1,8], index: 2, kind: input, shape index: {}]
  %s3 = inlined_call_operand.vmem [shape: f32[8,4], index: 3, kind: input, shape index: {}]
  %s4 = inlined_call_operand.vmem [shape: f32[1,4], index: 4, kind: input, shape index: {}]
  %s5 = inlined_call_operand.vmem [shape: f32[2,4,256], index: 5, kind: output, shape index: {}]
  %s6 = sld [smem:[#allocation0]]
  $region30: #{se_layer.1} parent=0
    _
  %s8 = ssub.s32 1, %s6
  %s9 = scalar_select 0, %s8, %s6
  // Predicated region
  $region2: #{se_layer.1} parent=0 // pred_check
    _
  $region3: #{se_layer.1} parent=0 // pred_check_branch
    %11 = sbr.rel (0) target = $region5
  $region4: #{se_layer.1} parent=0 // pred_region
    _
  $region5: #{se_layer.1} parent=0 // pred_fallthru
    _
  // Predicated region
  $region6: #{se_layer.1} parent=0 // pred_check
    _
  $region7: #{se_layer.1} parent=0 // pred_check_branch
    %13 = sbr.rel (0) target = $region9
  $region8: #{se_layer.1} parent=0 // pred_region
    _
  $region9: #{se_layer.1} parent=0 // pred_fallthru
    _
  // Predicated region
  $region10: #{se_layer.1} parent=0 // pred_check
    _
  $region11: #{se_layer.1} parent=0 // pred_check_branch
    %15 = sbr.rel (0) target = $region13
  $region12: #{se_layer.1} parent=0 // pred_region
    _
  $region13: #{se_layer.1} parent=0 // pred_fallthru
    _
  // Predicated region
  $region14: #{se_layer.1} parent=0 // pred_check
    _
  $region15: #{se_layer.1} parent=0 // pred_check_branch
    %17 = sbr.rel (0) target = $region17
  $region16: #{se_layer.1} parent=0 // pred_region
    _
  $region17: #{se_layer.1} parent=0 // pred_fallthru
    _
  // Predicated region
  $region18: #{se_layer.1} parent=0 // pred_check
    _
  $region19: #{se_layer.1} parent=0 // pred_check_branch
    %19 = sbr.rel (0) target = $region21
  $region20: #{se_layer.1} parent=0 // pred_region
    _
  $region21: #{se_layer.1} parent=0 // pred_fallthru
    _
  %v20 = vld [vmem:[%s0] sm:$0xff]
  %v21 = vld [vmem:[%s0 + $0x8] sm:$0xff]
  %24 = vst [vmem:[#allocation1] ss:$2 sm:$0xff] %v20
  %v25 = vld.sshfl [vmem:[#allocation1] sm:$0xff pattern:$0x75316420]
  %v26 = vld.sshfl [vmem:[#allocation1 + $0x8] sm:$0xff pattern:$0x75316420]
  %s27 = scalar_lea.vmem [#allocation1], 16
  %28 = vst [vmem:[%s27] ss:$2 sm:$0xff] %v21
  %v29 = vld.sshfl [vmem:[#allocation1 + $0x10] sm:$0xff pattern:$0x75316420]
  %v30 = vld.sshfl [vmem:[#allocation1 + $0x18] sm:$0xff pattern:$0x75316420]
  %vm35 = vcmask 1043456
  %v36 = vsel %vm35, %v25, 0.0
  %v37 = vsel %vm35, %v26, 0.0
  %v38 = vadd.f32 %v36, %v37
  %39 = vadd.xlane.f32.xlu0 %v38
  %v40 = vpop.xlane.xlu0 %39
  %v41 = vsel %vm35, %v29, 0.0
  %v42 = vsel %vm35, %v30, 0.0
  %v43 = vadd.f32 %v41, %v42
  %44 = vadd.xlane.f32.xlu0 %v43
  %v45 = vpop.xlane.xlu0 %44
  %v46 = vmul.f32 %v40, 0.00390625
  %v47 = vmul.f32 %v45, 0.00390625
  %v48 = vld [vmem:[%s1] sm:$0xf]
  %v49 = vld [vmem:[%s2] sm:$0x1]
  %v51 = vperm.slane %v49, 0
  %v55 = vlaneseq
  %v56 = vand.u32 %v55, 127
  %v57 = vperm.slane %v46, %v56
  %v58 = vperm.slane %v47, %v56
  %vm59 = vcmask 1041409
  %v60 = vsel %vm59, %v58, %v57
  %vm61 = vcmask 31744
  %v62 = vsel %vm61, %v60, 0
  %v65 = vsel %vm35, %v48, 0
  %67 = vmatpush.msra.mxu0 0.0
  %68 = vmatpush.msra.mxu0 0.0
  %69 = vmatpush.msra.mxu0 0.0
  %70 = vmatpush.msra.mxu0 0.0
  %71 = vmatpush.msra.mxu0 0.0
  %72 = vmatpush.msra.mxu0 0.0
  %73 = vmatpush.msra.mxu0 0.0
  %74 = vmatpush.msra.mxu0 0.0
  %75 = vmatpush.msra.mxu0 0.0
  %76 = vmatpush.msra.mxu0 0.0
  %77 = vmatpush.msra.mxu0 0.0
  %78 = vmatpush.msra.mxu0 0.0
  %79 = vmatpush.msra.mxu0 0.0
  %80 = vmatpush.msra.mxu0 0.0
  %81 = vmatpush.msra.mxu0 0.0
  %82 = vmatpush.msra.mxu0 %v65
  %83 = vmatmul.f32.gmra.mxu0 %v62
  %v84 = vpop.f32.mrf.mxu0
  %v85 = vadd.f32 %v51, %v84
  %86 = vdwg.mxu0
  %v87 = vxor.u32 %v85, 2147483648
  %v88 = vmul.f32 %v87, 1.442695
  %v89 = vpow.pop %v88
  %v90 = vadd.f32 %v89, 1.0
  %v91 = vrcp.pop %v90
  %v92 = vmul.f32 %v90, %v91
  %v93 = vsub.f32 1.0, %v92
  %v94 = vmul.f32 %v91, %v93
  %v95 = vadd.f32 %v91, %v94
  %vm96 = vweird.f32 %v90
  %vm97 = vweird.f32 %v91
  %vm98 = vmor %vm96, %vm97
  %v99 = vsel %vm98, %v91, %v95
  %v100 = vand.u32 2147483647, %v90
  %vm101 = vcmp.eq.f32.partialorder %v100, 8.507059e+37
  %v102 = vand.u32 %v90, 2147483648
  %v103 = vor.u32 1.1754944e-38, %v102
  %v104 = vsel %vm101, %v103, %v99
  %v105 = vmul.f32 1.0, %v104
  %v106 = vmul.f32 %v85, %v105
  %v107 = vld [vmem:[%s3] sm:$0xff]
  %v108 = vld [vmem:[%s4] sm:$0x1]
  %v110 = vperm.slane %v108, 0
  %vm112 = vcmask 64512
  %v114 = vsel %vm112, %v106, 0
  %116 = vmatpush.msra.mxu0 0.0
  %117 = vmatpush.msra.mxu0 0.0
  %118 = vmatpush.msra.mxu0 0.0
  %119 = vmatpush.msra.mxu0 0.0
  %120 = vmatpush.msra.mxu0 0.0
  %121 = vmatpush.msra.mxu0 0.0
  %122 = vmatpush.msra.mxu0 0.0
  %123 = vmatpush.msra.mxu0 0.0
  %124 = vmatpush.msra.mxu0 0.0
  %125 = vmatpush.msra.mxu0 0.0
  %126 = vmatpush.msra.mxu0 0.0
  %127 = vmatpush.msra.mxu0 0.0
  %128 = vmatpush.msra.mxu0 0.0
  %129 = vmatpush.msra.mxu0 0.0
  %130 = vmatpush.msra.mxu0 0.0
  %131 = vmatpush.msra.mxu0 %v107
  %132 = vmatmul.f32.gmra.mxu0 %v114
  %v133 = vpop.f32.mrf.mxu0
  %v134 = vadd.f32 %v110, %v133
  %135 = vdwg.mxu0
  %v136 = vxor.u32 %v134, 2147483648
  %v137 = vmul.f32 %v136, 1.442695
  %v138 = vpow.pop %v137
  %v139 = vadd.f32 %v138, 1.0
  %v140 = vrcp.pop %v139
  %v141 = vmul.f32 %v139, %v140
  %v142 = vsub.f32 1.0, %v141
  %v143 = vmul.f32 %v140, %v142
  %v144 = vadd.f32 %v140, %v143
  %vm145 = vweird.f32 %v139
  %vm146 = vweird.f32 %v140
  %vm147 = vmor %vm145, %vm146
  %v148 = vsel %vm147, %v140, %v144
  %v149 = vand.u32 2147483647, %v139
  %vm150 = vcmp.eq.f32.partialorder %v149, 8.507059e+37
  %v151 = vand.u32 %v139, 2147483648
  %v152 = vor.u32 1.1754944e-38, %v151
  %v153 = vsel %vm150, %v152, %v148
  %v154 = vmul.f32 1.0, %v153
  %v155 = vperm.slane %v154, 0
  %v156 = vlaneseq
  %v157 = vshrl.u32 %v156, 7
  %159 = vset.pattern.permute.xlu0 %v157
  %160 = vperm.xlu0 %159, %v155
  %v161 = vpop.permute.xlu0 %160
  %v162 = vperm.slane %v154, 1
  %v163 = vlaneseq
  %v164 = vshrl.u32 %v163, 7
  %166 = vset.pattern.permute.xlu0 %v164
  %167 = vperm.xlu0 %166, %v162
  %v168 = vpop.permute.xlu0 %167
  %v172 = vunpack.c.l.s4 839922192
  %v173 = vunpack.c.0.s8 %v172
  %v174 = vperm.slane %v161, %v173
  %v176 = vunpack.c.l.s4 839922192
  %v177 = vunpack.c.0.s8 %v176
  %v178 = vperm.slane %v168, %v177
  %v181 = vmul.f32 %v20, %v174
  %v182 = vmul.f32 %v21, %v178
  %183 = vst [vmem:[%s5] sm:$0xff] %v181
  %184 = vst [vmem:[%s5 + $0x8] sm:$0xff] %v182
  // Predicated region
  $region22: #{se_layer.1} parent=0 // pred_check
    _
  $region23: #{se_layer.1} parent=0 // pred_check_branch
    %186 = sbr.rel (0) target = $region25
  $region24: #{se_layer.1} parent=0 // pred_region
    _
  $region25: #{se_layer.1} parent=0 // pred_fallthru
    _
  // Predicated region
  $region26: #{se_layer.1} parent=0 // pred_check
    _
  $region27: #{se_layer.1} parent=0 // pred_check_branch
    %188 = sbr.rel (0) target = $region29
  $region28: #{se_layer.1} parent=0 // pred_region
    _
  $region29: #{se_layer.1} parent=0 // pred_fallthru
    _

</llo_original>
